<compile_context>
chip_gen: v6e
topology: v6e:2x2x1
jax: 0.10.0
libtpu: 0.0.40
codegen_flags: <defaults>
</compile_context>

<pallas_src>
import functools

import jax
import jax.numpy as jnp
import numpy as np
from jax.experimental import pallas as pl
from jax.experimental.pallas import tpu as pltpu

NUM_CLASSES = 10
HIDDEN = 128                 # hidden_size (lane-dense: multiple of 128)
VOCAB = NUM_CLASSES + 1
ROWS_PER_STEP = 8            # batch rows gathered per grid step (sublane-aligned)


def _embed_block_kernel(labels_ref, table_ref, out_ref, *, rows_per_step):
    # labels_ref: (B_padded,) int32 scalar-prefetch ref (SMEM).
    # table_ref:  (V, H) full embedding table, resident in VMEM (fetched once).
    # out_ref:    (rows_per_step, H) output tile for this grid step.
    base = pl.program_id(0) * rows_per_step
    for j in range(rows_per_step):           # static unroll; rows_per_step is small
        lab = labels_ref[base + j]           # scalar read from SMEM
        out_ref[pl.ds(j, 1), :] = table_ref[pl.ds(lab, 1), :]


def label_embedder_forward(labels, table, dropout_prob, *, key=None,
                           force_drop_ids=None, num_classes=NUM_CLASSES):
    """Pallas equivalent of LabelEmbedder.forward (returns (embeddings, drop_ids))."""
    B = labels.shape[0]
    V, H = table.shape

    # --- token_drop in the wrapper -----------------------------------------
    if force_drop_ids is not None:
        drop_ids = (force_drop_ids == 1)
    elif dropout_prob > 0:
        # TODO(synk): uses jax.random instead of torch.rand (same semantics,
        # not bit-identical RNG stream).
        drop_ids = jax.random.uniform(key, (B,)) < dropout_prob
    else:
        drop_ids = jnp.zeros((B,), jnp.bool_)

    final_labels = jnp.where(drop_ids, num_classes, labels.astype(jnp.int32))
    # Clamp so an out-of-range label can never produce an OOB VMEM slice.
    final_labels = jnp.clip(final_labels, 0, V - 1).astype(jnp.int32)

    # --- pad batch to a multiple of ROWS_PER_STEP ---------------------------
    tb = ROWS_PER_STEP
    b_padded = ((B + tb - 1) // tb) * tb
    if b_padded != B:
        final_labels = jnp.pad(final_labels, (0, b_padded - B))

    kernel = functools.partial(_embed_block_kernel, rows_per_step=tb)

    out = pl.pallas_call(
        kernel,
        out_shape=jax.ShapeDtypeStruct((b_padded, H), table.dtype),
        grid_spec=pltpu.PrefetchScalarGridSpec(
            num_scalar_prefetch=1,           # final_labels -> SMEM
            grid=(b_padded // tb,),
            in_specs=[
                # Whole (tiny) table; constant block index => fetched once.
                pl.BlockSpec((V, H), lambda i, labels: (0, 0)),
            ],
            out_specs=pl.BlockSpec((tb, H), lambda i, labels: (i, 0)),
        ),
        compiler_params=pltpu.CompilerParams(
            dimension_semantics=("parallel",),   # batch tiles are independent
        ),
    )(final_labels, table)

    if b_padded != B:
        out = out[:B]
    return out, drop_ids.astype(jnp.int32)


if __name__ == "__main__":
    key = jax.random.PRNGKey(0)
    k_table, k_labels, k_drop = jax.random.split(key, 3)

    B = 8
    dropout_prob = 0.25

    # Deterministic parameter init (nn.Embedding(num_classes + 1, hidden)).
    table = jax.random.normal(k_table, (VOCAB, HIDDEN), dtype=jnp.float32)

    # Example labels.
    labels = jax.random.randint(k_labels, (B,), 0, NUM_CLASSES, dtype=jnp.int32)

    # 1) Dropout path.
    emb, drop_ids = label_embedder_forward(labels, table, dropout_prob, key=k_drop)
    emb = jax.block_until_ready(emb)
    final_labels = jnp.where(drop_ids == 1, NUM_CLASSES, labels)
    ref = table[final_labels]
    np.testing.assert_allclose(np.asarray(emb), np.asarray(ref), rtol=1e-6, atol=1e-6)

    # 2) force_drop_ids path (no RNG).
    force = jnp.array([1, 0, 1, 0, 0, 0, 1, 0], dtype=jnp.int32)
    emb2, _ = label_embedder_forward(labels, table, 0.0, force_drop_ids=force)
    emb2 = jax.block_until_ready(emb2)
    ref2 = table[jnp.where(force == 1, NUM_CLASSES, labels)]
    np.testing.assert_allclose(np.asarray(emb2), np.asarray(ref2), rtol=1e-6, atol=1e-6)

    # 3) no-dropout path.
    emb3, _ = label_embedder_forward(labels, table, 0.0)
    emb3 = jax.block_until_ready(emb3)
    np.testing.assert_allclose(np.asarray(emb3), np.asarray(table[labels]),
                               rtol=1e-6, atol=1e-6)

    # 4) batch size not a multiple of ROWS_PER_STEP (padding path).
    labels5 = labels[:5]
    emb4, _ = label_embedder_forward(labels5, table, 0.0)
    emb4 = jax.block_until_ready(emb4)
    np.testing.assert_allclose(np.asarray(emb4), np.asarray(table[labels5]),
                               rtol=1e-6, atol=1e-6)

    print("KERNEL_OK")
</pallas_src>

<mosaic_0001>
module attributes {stable_mosaic.version = 11 : i64} {
  func.func @_embed_block_kernel(%arg0: i32, %arg1: memref<8xi32, #tpu.memory_space<smem>>, %arg2: memref<11x128xf32, #tpu.memory_space<vmem>>, %arg3: memref<8x128xf32, #tpu.memory_space<vmem>>) attributes {dimension_semantics = [#tpu.dimension_semantics<parallel>], iteration_bounds = array<i64: 1>, scalar_prefetch = 1 : i64, scratch_operands = 0 : i64, tpu.core_type = #tpu.core_type<tc>, window_params = [{pipeline_mode = #tpu.pipeline_mode<synchronous>, transform_indices = @transform_0, window_bounds = array<i64: 11, 128>}, {transform_indices = @transform_1, window_bounds = array<i64: 8, 128>}]} {
    %c8_i32 = arith.constant 8 : i32
    %0 = arith.muli %arg0, %c8_i32 : i32
    %c0_i32 = arith.constant 0 : i32
    %1 = arith.addi %0, %c0_i32 : i32
    %2 = arith.index_cast %1 : i32 to index
    %3 = memref.load %arg1[%2] : memref<8xi32, #tpu.memory_space<smem>>
    %4 = arith.index_cast %3 : i32 to index
    %c0 = arith.constant 0 : index
    %5 = vector.load %arg2[%4, %c0] : memref<11x128xf32, #tpu.memory_space<vmem>>, vector<1x128xf32>
    %c0_0 = arith.constant 0 : index
    %c0_1 = arith.constant 0 : index
    %6 = vector.load %arg3[%c0_0, %c0_1] : memref<8x128xf32, #tpu.memory_space<vmem>>, vector<1x128xf32>
    tpu.vector_store %arg3[%c0_0, %c0_1], %5 {strides = array<i32>} : memref<8x128xf32, #tpu.memory_space<vmem>>, vector<1x128xf32>,
    %c1_i32 = arith.constant 1 : i32
    %7 = arith.addi %0, %c1_i32 : i32
    %8 = arith.index_cast %7 : i32 to index
    %9 = memref.load %arg1[%8] : memref<8xi32, #tpu.memory_space<smem>>
    %10 = arith.index_cast %9 : i32 to index
    %c0_2 = arith.constant 0 : index
    %11 = vector.load %arg2[%10, %c0_2] : memref<11x128xf32, #tpu.memory_space<vmem>>, vector<1x128xf32>
    %c1 = arith.constant 1 : index
    %c0_3 = arith.constant 0 : index
    %12 = vector.load %arg3[%c1, %c0_3] : memref<8x128xf32, #tpu.memory_space<vmem>>, vector<1x128xf32>
    tpu.vector_store %arg3[%c1, %c0_3], %11 {strides = array<i32>} : memref<8x128xf32, #tpu.memory_space<vmem>>, vector<1x128xf32>,
    %c2_i32 = arith.constant 2 : i32
    %13 = arith.addi %0, %c2_i32 : i32
    %14 = arith.index_cast %13 : i32 to index
    %15 = memref.load %arg1[%14] : memref<8xi32, #tpu.memory_space<smem>>
    %16 = arith.index_cast %15 : i32 to index
    %c0_4 = arith.constant 0 : index
    %17 = vector.load %arg2[%16, %c0_4] : memref<11x128xf32, #tpu.memory_space<vmem>>, vector<1x128xf32>
    %c2 = arith.constant 2 : index
    %c0_5 = arith.constant 0 : index
    %18 = vector.load %arg3[%c2, %c0_5] : memref<8x128xf32, #tpu.memory_space<vmem>>, vector<1x128xf32>
    tpu.vector_store %arg3[%c2, %c0_5], %17 {strides = array<i32>} : memref<8x128xf32, #tpu.memory_space<vmem>>, vector<1x128xf32>,
    %c3_i32 = arith.constant 3 : i32
    %19 = arith.addi %0, %c3_i32 : i32
    %20 = arith.index_cast %19 : i32 to index
    %21 = memref.load %arg1[%20] : memref<8xi32, #tpu.memory_space<smem>>
    %22 = arith.index_cast %21 : i32 to index
    %c0_6 = arith.constant 0 : index
    %23 = vector.load %arg2[%22, %c0_6] : memref<11x128xf32, #tpu.memory_space<vmem>>, vector<1x128xf32>
    %c3 = arith.constant 3 : index
    %c0_7 = arith.constant 0 : index
    %24 = vector.load %arg3[%c3, %c0_7] : memref<8x128xf32, #tpu.memory_space<vmem>>, vector<1x128xf32>
    tpu.vector_store %arg3[%c3, %c0_7], %23 {strides = array<i32>} : memref<8x128xf32, #tpu.memory_space<vmem>>, vector<1x128xf32>,
    %c4_i32 = arith.constant 4 : i32
    %25 = arith.addi %0, %c4_i32 : i32
    %26 = arith.index_cast %25 : i32 to index
    %27 = memref.load %arg1[%26] : memref<8xi32, #tpu.memory_space<smem>>
    %28 = arith.index_cast %27 : i32 to index
    %c0_8 = arith.constant 0 : index
    %29 = vector.load %arg2[%28, %c0_8] : memref<11x128xf32, #tpu.memory_space<vmem>>, vector<1x128xf32>
    %c4 = arith.constant 4 : index
    %c0_9 = arith.constant 0 : index
    %30 = vector.load %arg3[%c4, %c0_9] : memref<8x128xf32, #tpu.memory_space<vmem>>, vector<1x128xf32>
    tpu.vector_store %arg3[%c4, %c0_9], %29 {strides = array<i32>} : memref<8x128xf32, #tpu.memory_space<vmem>>, vector<1x128xf32>,
    %c5_i32 = arith.constant 5 : i32
    %31 = arith.addi %0, %c5_i32 : i32
    %32 = arith.index_cast %31 : i32 to index
    %33 = memref.load %arg1[%32] : memref<8xi32, #tpu.memory_space<smem>>
    %34 = arith.index_cast %33 : i32 to index
    %c0_10 = arith.constant 0 : index
    %35 = vector.load %arg2[%34, %c0_10] : memref<11x128xf32, #tpu.memory_space<vmem>>, vector<1x128xf32>
    %c5 = arith.constant 5 : index
    %c0_11 = arith.constant 0 : index
    %36 = vector.load %arg3[%c5, %c0_11] : memref<8x128xf32, #tpu.memory_space<vmem>>, vector<1x128xf32>
    tpu.vector_store %arg3[%c5, %c0_11], %35 {strides = array<i32>} : memref<8x128xf32, #tpu.memory_space<vmem>>, vector<1x128xf32>,
    %c6_i32 = arith.constant 6 : i32
    %37 = arith.addi %0, %c6_i32 : i32
    %38 = arith.index_cast %37 : i32 to index
    %39 = memref.load %arg1[%38] : memref<8xi32, #tpu.memory_space<smem>>
    %40 = arith.index_cast %39 : i32 to index
    %c0_12 = arith.constant 0 : index
    %41 = vector.load %arg2[%40, %c0_12] : memref<11x128xf32, #tpu.memory_space<vmem>>, vector<1x128xf32>
    %c6 = arith.constant 6 : index
    %c0_13 = arith.constant 0 : index
    %42 = vector.load %arg3[%c6, %c0_13] : memref<8x128xf32, #tpu.memory_space<vmem>>, vector<1x128xf32>
    tpu.vector_store %arg3[%c6, %c0_13], %41 {strides = array<i32>} : memref<8x128xf32, #tpu.memory_space<vmem>>, vector<1x128xf32>,
    %c7_i32 = arith.constant 7 : i32
    %43 = arith.addi %0, %c7_i32 : i32
    %44 = arith.index_cast %43 : i32 to index
    %45 = memref.load %arg1[%44] : memref<8xi32, #tpu.memory_space<smem>>
    %46 = arith.index_cast %45 : i32 to index
    %c0_14 = arith.constant 0 : index
    %47 = vector.load %arg2[%46, %c0_14] : memref<11x128xf32, #tpu.memory_space<vmem>>, vector<1x128xf32>
    %c7 = arith.constant 7 : index
    %c0_15 = arith.constant 0 : index
    %48 = vector.load %arg3[%c7, %c0_15] : memref<8x128xf32, #tpu.memory_space<vmem>>, vector<1x128xf32>
    tpu.vector_store %arg3[%c7, %c0_15], %47 {strides = array<i32>} : memref<8x128xf32, #tpu.memory_space<vmem>>, vector<1x128xf32>,
    return
  }
  func.func @transform_0(%arg0: i32, %arg1: memref<8xi32, #tpu.memory_space<smem>>) -> (i32, i32) {
    %c0_i32 = arith.constant 0 : i32
    %c0_i32_0 = arith.constant 0 : i32
    %c0_i32_1 = arith.constant 0 : i32
    return %c0_i32, %c0_i32_0 : i32, i32
  }
  func.func @transform_1(%arg0: i32, %arg1: memref<8xi32, #tpu.memory_space<smem>>) -> (i32, i32) {
    %c0_i32 = arith.constant 0 : i32
    %c0_i32_0 = arith.constant 0 : i32
    return %arg0, %c0_i32 : i32, i32
  }
}

</mosaic_0001>

<llo_original>
// kernel: tpu_custom_call.1
$region0: #{tpu_custom_call.1}
  #allocation0 [shape = 'u32[]', space=smem, size = 0x4, offset = 0x4, fixed_abs, tag = 'smem constant byte address 0x4 - core index']
  #allocation1 [shape = 'u32[144,128]{1,0:T(1,128)}', space=vmem, size = 0x12000, scoped, tag = 'internal scratch']
  #allocation2 [shape = 's32[1]{0}', space=sflag, size = 0x4, scoped, tag = 'scoped memory for tpu_custom_call.1']
  #allocation3 [shape = 'u8[512]{0}', space=smem, size = 0x200, scoped, tag = 'prefetched SMEM operand 0']
  %s0 = inlined_call_operand.hbm [shape: s32[8], index: 0, kind: input, shape index: {}]
  %s1 = inlined_call_operand.hbm [shape: f32[11,128], index: 1, kind: input, shape index: {}]
  %s2 = inlined_call_operand.hbm [shape: f32[8,128], index: 2, kind: output, shape index: {}]
  %s3 = sld [smem:[#allocation0]]
  $region18: #{tpu_custom_call.1} parent=0
    _
  %s5 = ssub.s32 1, %s3
  %s6 = scalar_select 0, %s5, %s3
  %8 = dma.hbm_to_smem %s0, 16, [#allocation3], [#allocation2]
  %9 = dma.done [#allocation2], 16
  %10 = sfence
  $region1: #{tpu_custom_call.1} parent=0
    #allocation4 [shape = 'u8[8192]{0}', space=vmem, size = 0x2000, scoped, tag = 'input window, operand 1, single buffered']
    #allocation5 [shape = 's32[1]{0}', space=sflag, size = 0x4, scoped, tag = 'scoped memory for tpu_custom_call.1']
    #allocation6 [shape = 's32[1]{0}', space=sflag, size = 0x4, scoped, tag = 'scoped memory for tpu_custom_call.1']
    #allocation7 [shape = 'u8[4096]{0}', space=vmem, size = 0x1000, scoped, tag = 'output window, operand 0, single buffered']
    %11 = vsyncpa [#allocation5], 0
    %12 = vsyncpa [#allocation6], 0
    // Predicated region
    $region2: #{tpu_custom_call.1} parent=1 // pred_check
      _
    $region3: #{tpu_custom_call.1} parent=1 // pred_check_branch
      %14 = sbr.rel (0) target = $region5
    $region4: #{tpu_custom_call.1} parent=1 // pred_region
      %s16 = ssub.s32 256, 256
      %17 = vsyncadd [#allocation5], %s16
      %s18 = sshll.u32 [#allocation4], 4
      %s19 = int_to_ptr.vmem [resolvable:$true] %s18
      %24 = dma.hbm_to_vmem [thread:$0]  %s1, 256, %s19, [#allocation5], 128, 128, 8
    $region5: #{tpu_custom_call.1} parent=1 // pred_fallthru
      _
    // Predicated region
    $region6: #{tpu_custom_call.1} parent=1 // pred_check
      _
    $region7: #{tpu_custom_call.1} parent=1 // pred_check_branch
      %26 = sbr.rel (0) target = $region9
    $region8: #{tpu_custom_call.1} parent=1 // pred_region
      %27 = dma.done [#allocation5], 256
    $region9: #{tpu_custom_call.1} parent=1 // pred_fallthru
      _
    %s28 = smul.u32 0, 8
    %s29 = sld [smem:[#allocation3 + %s28]]
    %s30 = scalar_lea.vmem [#allocation4], %s29
    %v31 = vld [vmem:[%s30] sm:$0x1]
    %32 = vst [vmem:[#allocation7] sm:$0x1] %v31
    %s33 = sadd.s32 %s28, 1
    %s34 = sld [smem:[#allocation3 + %s33]]
    %s35 = scalar_lea.vmem [#allocation4], %s34
    %v36 = vld [vmem:[%s35] sm:$0x1]
    %37 = vst [vmem:[#allocation7 + $0x1] sm:$0x1] %v36
    %s38 = sadd.s32 %s28, 2
    %s39 = sld [smem:[#allocation3 + %s38]]
    %s40 = scalar_lea.vmem [#allocation4], %s39
    %v41 = vld [vmem:[%s40] sm:$0x1]
    %42 = vst [vmem:[#allocation7 + $0x2] sm:$0x1] %v41
    %s43 = sadd.s32 %s28, 3
    %s44 = sld [smem:[#allocation3 + %s43]]
    %s45 = scalar_lea.vmem [#allocation4], %s44
    %v46 = vld [vmem:[%s45] sm:$0x1]
    %47 = vst [vmem:[#allocation7 + $0x3] sm:$0x1] %v46
    %s48 = sadd.s32 %s28, 4
    %s49 = sld [smem:[#allocation3 + %s48]]
    %s50 = scalar_lea.vmem [#allocation4], %s49
    %v51 = vld [vmem:[%s50] sm:$0x1]
    %52 = vst [vmem:[#allocation7 + $0x4] sm:$0x1] %v51
    %s53 = sadd.s32 %s28, 5
    %s54 = sld [smem:[#allocation3 + %s53]]
    %s55 = scalar_lea.vmem [#allocation4], %s54
    %v56 = vld [vmem:[%s55] sm:$0x1]
    %57 = vst [vmem:[#allocation7 + $0x5] sm:$0x1] %v56
    %s58 = sadd.s32 %s28, 6
    %s59 = sld [smem:[#allocation3 + %s58]]
    %s60 = scalar_lea.vmem [#allocation4], %s59
    %v61 = vld [vmem:[%s60] sm:$0x1]
    %62 = vst [vmem:[#allocation7 + $0x6] sm:$0x1] %v61
    %s63 = sadd.s32 %s28, 7
    %s64 = sld [smem:[#allocation3 + %s63]]
    %s65 = scalar_lea.vmem [#allocation4], %s64
    %v66 = vld [vmem:[%s65] sm:$0x1]
    %67 = vst [vmem:[#allocation7 + $0x7] sm:$0x1] %v66
    // Predicated region
    $region10: #{tpu_custom_call.1} parent=1 // pred_check
      _
    $region11: #{tpu_custom_call.1} parent=1 // pred_check_branch
      %69 = sbr.rel (0) target = $region13
    $region12: #{tpu_custom_call.1} parent=1 // pred_region
      %s71 = ssub.s32 128, 128
      %72 = vsyncadd [#allocation6], %s71
      %s74 = sshll.u32 [#allocation7], 4
      %s75 = int_to_ptr.vmem [resolvable:$true] %s74
      %77 = dma.vmem_to_hbm [thread:$0]  %s75, 128, %s2, [#allocation6]
    $region13: #{tpu_custom_call.1} parent=1 // pred_fallthru
      _
    // Predicated region
    $region14: #{tpu_custom_call.1} parent=1 // pred_check
      _
    $region15: #{tpu_custom_call.1} parent=1 // pred_check_branch
      %79 = sbr.rel (0) target = $region17
    $region16: #{tpu_custom_call.1} parent=1 // pred_region
      %80 = dma.done [#allocation6], 128
    $region17: #{tpu_custom_call.1} parent=1 // pred_fallthru
      _
    %81 = vsyncpa [#allocation5], 1
    %82 = vsyncpa [#allocation6], 1

</llo_original>
